<compile_context>
chip_gen: v5e
topology: v5e:2x2
jax: 0.10.0
libtpu: 0.0.40
codegen_flags: <defaults>
</compile_context>

<pallas_src>
import math
import jax
import jax.numpy as jnp
from jax.experimental import pallas as pl
from jax.experimental.pallas import tpu as pltpu

# ---- small, ViT-consistent synthetic config ----
BATCH = 2
SEQ = 8            # number of tokens
HIDDEN = 32        # config.hidden_size
NUM_HEADS = 4      # config.transformer['num_heads']
HEAD_DIM = HIDDEN // NUM_HEADS
SCALE = 1.0 / math.sqrt(HEAD_DIM)


def attention_kernel(x_ref, wqkv_ref, bqkv_ref, wo3_ref, bo_ref,
                     out_ref, probs_ref):
    """Single invocation (grid=()), whole batch per call.

    x_ref    : (B*S, H)      f32   hidden states with batch folded into rows
    wqkv_ref : (H, 3H)       bf16  fused [Wq*scale | Wk | Wv]
    bqkv_ref : (1, 3H)       f32   fused [bq*scale | bk | bv]
    wo3_ref  : (NH, hd, H)   bf16  out-proj weight, head-major (concat folded)
    bo_ref   : (1, H)        f32
    out_ref  : (B*S, H)      f32   attention_output
    probs_ref: (B, NH, S, S) f32   attention probs (`weights`, vis=True)
    """
    bs = BATCH * SEQ
    x = x_ref[...].astype(jnp.bfloat16)                               # (B*S, H)

    # ---- fused QKV projection: one MXU matmul, bf16 operands, f32 accumulate.
    qkv = jnp.dot(x, wqkv_ref[...],
                  preferred_element_type=jnp.float32) + bqkv_ref[...]  # (B*S, 3H)

    out_acc = jnp.zeros((bs, HIDDEN), jnp.float32)
    probs_per_head = []

    for h in range(NUM_HEADS):  # static Python loop, unrolled at trace time
        lo = h * HEAD_DIM
        # Per-head Q/K/V as VALUES: static lane slices + leading-dim reshape
        # (splitting B*S -> (B, S) touches only the sublane-batch dims).
        q_h = qkv[:, lo:lo + HEAD_DIM] \
            .reshape(BATCH, SEQ, HEAD_DIM).astype(jnp.bfloat16)
        k_h = qkv[:, HIDDEN + lo:HIDDEN + lo + HEAD_DIM] \
            .reshape(BATCH, SEQ, HEAD_DIM).astype(jnp.bfloat16)
        v_h = qkv[:, 2 * HIDDEN + lo:2 * HIDDEN + lo + HEAD_DIM] \
            .reshape(BATCH, SEQ, HEAD_DIM).astype(jnp.bfloat16)

        # ---- batched-over-B scores; SCALE already folded into the Q weights.
        s_h = jnp.einsum('bqd,bkd->bqk', q_h, k_h,
                         preferred_element_type=jnp.float32)           # (B, S, S)

        # ---- numerically stable softmax in f32; exact divide because these
        # probabilities are also returned as the module's `weights` output.
        s_h = s_h - jnp.max(s_h, axis=-1, keepdims=True)
        e_h = jnp.exp(s_h)
        p_h = e_h / jnp.sum(e_h, axis=-1, keepdims=True)               # (B, S, S)
        probs_per_head.append(p_h)

        # attn_dropout: identity in eval mode.

        # ---- context for this head, batched over B.
        ctx_h = jnp.einsum('bqk,bkd->bqd', p_h.astype(jnp.bfloat16), v_h,
                           preferred_element_type=jnp.float32)         # (B, S, hd)

        # ---- head-concat folded into the out-projection: accumulate
        # (B*S, hd) @ (hd, H) per head on the MXU instead of a lane concat.
        out_acc = out_acc + jnp.dot(
            ctx_h.reshape(bs, HEAD_DIM).astype(jnp.bfloat16),
            wo3_ref[h],
            preferred_element_type=jnp.float32)                        # (B*S, H)

    # single staged writeback of all heads' probs (stack along a leading dim).
    probs_ref[...] = jnp.stack(probs_per_head, axis=1).astype(probs_ref.dtype)

    out_ref[...] = (out_acc + bo_ref[...]).astype(out_ref.dtype)
    # proj_dropout: identity in eval mode.


def attention_forward(x, params):
    """x: (B, S, H) float32.  params: dict of pre-transposed f32 weights/biases."""
    B, S, H = x.shape

    # Host-side constant folding (weights are constants, so this is NOT the
    # "pre-scale activations in the wrapper" anti-pattern):
    #   * fuse Q/K/V weights into one (H, 3H) bf16 matrix, scale folded into Q
    #   * fuse biases into one (1, 3H) f32 vector, scale folded into bq
    #   * reshape out-proj weight to (NH, hd, H) so the head concat disappears.
    wqkv = jnp.concatenate(
        [params["wq"] * SCALE, params["wk"], params["wv"]],
        axis=1).astype(jnp.bfloat16)                                   # (H, 3H)
    bqkv = jnp.concatenate(
        [params["bq"] * SCALE, params["bk"], params["bv"]], axis=1)    # (1, 3H)
    wo3 = params["wo"].reshape(NUM_HEADS, HEAD_DIM, HIDDEN).astype(jnp.bfloat16)
    bo = params["bo"]                                                  # (1, H)

    x2 = x.reshape(B * S, H)   # fold batch into rows -> one kernel invocation

    vmem = pl.BlockSpec(memory_space=pltpu.MemorySpace.VMEM)
    out2, probs = pl.pallas_call(
        attention_kernel,
        out_shape=(
            jax.ShapeDtypeStruct((B * S, H), x.dtype),                 # attention_output
            jax.ShapeDtypeStruct((B, NUM_HEADS, S, S), jnp.float32),   # weights (probs)
        ),
        in_specs=[vmem, vmem, vmem, vmem, vmem],
        out_specs=(vmem, vmem),
    )(x2, wqkv, bqkv, wo3, bo)

    return out2.reshape(B, S, H), probs


def init_params(key):
    """Deterministic synthetic parameters matching nn.Linear(H, H) x4.

    Weights are stored as (in, out) = PyTorch weight.T; biases as (1, H)."""
    ks = jax.random.split(key, 8)
    bound = 1.0 / math.sqrt(HIDDEN)

    def u(k, shape):
        return jax.random.uniform(k, shape, jnp.float32, -bound, bound)

    return {
        "wq": u(ks[0], (HIDDEN, HIDDEN)), "bq": u(ks[1], (1, HIDDEN)),
        "wk": u(ks[2], (HIDDEN, HIDDEN)), "bk": u(ks[3], (1, HIDDEN)),
        "wv": u(ks[4], (HIDDEN, HIDDEN)), "bv": u(ks[5], (1, HIDDEN)),
        "wo": u(ks[6], (HIDDEN, HIDDEN)), "bo": u(ks[7], (1, HIDDEN)),
    }


def attention_reference(x, p):
    """Plain-JAX f32 reference mirroring the PyTorch forward (eval mode)."""
    B, S, H = x.shape
    q = x @ p["wq"] + p["bq"][0]
    k = x @ p["wk"] + p["bk"][0]
    v = x @ p["wv"] + p["bv"][0]

    def split(t):  # (B, S, H) -> (B, nh, S, hd)
        return t.reshape(B, S, NUM_HEADS, HEAD_DIM).transpose(0, 2, 1, 3)

    q, k, v = split(q), split(k), split(v)
    scores = jnp.einsum("bhqd,bhkd->bhqk", q, k) * SCALE
    probs = jax.nn.softmax(scores, axis=-1)
    ctx = jnp.einsum("bhqk,bhkd->bhqd", probs, v)
    ctx = ctx.transpose(0, 2, 1, 3).reshape(B, S, H)
    out = ctx @ p["wo"] + p["bo"][0]
    return out, probs


if __name__ == "__main__":
    key = jax.random.PRNGKey(0)
    kx, kp = jax.random.split(key)
    x = jax.random.normal(kx, (BATCH, SEQ, HIDDEN), jnp.float32)
    params = init_params(kp)

    out, weights = attention_forward(x, params)
    out = jax.block_until_ready(out)
    weights = jax.block_until_ready(weights)

    ref_out, ref_w = attention_reference(x, params)
    # bf16 MXU operands -> tolerance loosened vs pure-f32 reference.
    assert out.shape == ref_out.shape and weights.shape == ref_w.shape
    assert jnp.allclose(out, ref_out, atol=2e-2, rtol=2e-2)
    assert jnp.allclose(weights, ref_w, atol=2e-2, rtol=2e-2)

    print("KERNEL_OK")
</pallas_src>

<mosaic_0001>
module attributes {stable_mosaic.version = 11 : i64} {
  func.func @attention_kernel(%arg0: memref<16x32xf32, #tpu.memory_space<vmem>>, %arg1: memref<32x96xbf16, #tpu.memory_space<vmem>>, %arg2: memref<1x96xf32, #tpu.memory_space<vmem>>, %arg3: memref<4x8x32xbf16, #tpu.memory_space<vmem>>, %arg4: memref<1x32xf32, #tpu.memory_space<vmem>>, %arg5: memref<16x32xf32, #tpu.memory_space<vmem>>, %arg6: memref<2x4x8x8xf32, #tpu.memory_space<vmem>>) attributes {dimension_semantics = [], scalar_prefetch = 0 : i64, scratch_operands = 0 : i64, tpu.core_type = #tpu.core_type<tc>} {
    %c0 = arith.constant 0 : index
    %c0_0 = arith.constant 0 : index
    %0 = vector.load %arg0[%c0, %c0_0] : memref<16x32xf32, #tpu.memory_space<vmem>>, vector<16x32xf32>
    %1 = arith.truncf %0 : vector<16x32xf32> to vector<16x32xbf16>
    %c0_1 = arith.constant 0 : index
    %c0_2 = arith.constant 0 : index
    %2 = vector.load %arg1[%c0_1, %c0_2] : memref<32x96xbf16, #tpu.memory_space<vmem>>, vector<32x96xbf16>
    %cst = arith.constant dense<0.000000e+00> : vector<16x96xf32>
    %3 = tpu.matmul %1, %2, %cst {dimension_numbers = #tpu.dot_dimension_numbers<[1], [0], [0], [1], [0, 0, 1, 1], [], []>} : vector<16x32xbf16>, vector<32x96xbf16>, vector<16x96xf32> -> vector<16x96xf32>
    %c0_3 = arith.constant 0 : index
    %c0_4 = arith.constant 0 : index
    %4 = vector.load %arg2[%c0_3, %c0_4] : memref<1x96xf32, #tpu.memory_space<vmem>>, vector<1x96xf32>
    %5 = vector.broadcast %4 : vector<1x96xf32> to vector<16x96xf32>
    %6 = arith.addf %3, %5 : vector<16x96xf32>
    %cst_5 = arith.constant 0.000000e+00 : f32
    %7 = vector.broadcast %cst_5 : f32 to vector<16x32xf32>
    %8 = vector.extract_strided_slice %6 {offsets = [0, 0], sizes = [16, 8], strides = [1, 1]} : vector<16x96xf32> to vector<16x8xf32>
    %9 = vector.shape_cast %8 : vector<16x8xf32> to vector<2x8x8xf32>
    %10 = arith.truncf %9 : vector<2x8x8xf32> to vector<2x8x8xbf16>
    %11 = vector.extract_strided_slice %6 {offsets = [0, 32], sizes = [16, 8], strides = [1, 1]} : vector<16x96xf32> to vector<16x8xf32>
    %12 = vector.shape_cast %11 : vector<16x8xf32> to vector<2x8x8xf32>
    %13 = arith.truncf %12 : vector<2x8x8xf32> to vector<2x8x8xbf16>
    %14 = vector.extract_strided_slice %6 {offsets = [0, 64], sizes = [16, 8], strides = [1, 1]} : vector<16x96xf32> to vector<16x8xf32>
    %15 = vector.shape_cast %14 : vector<16x8xf32> to vector<2x8x8xf32>
    %16 = arith.truncf %15 : vector<2x8x8xf32> to vector<2x8x8xbf16>
    "tpu.trace_start"() <{level = 10 : i32, message = "bqd,bkd->bqk"}> : () -> ()
    %cst_6 = arith.constant dense<0.000000e+00> : vector<2x8x8xf32>
    %17 = tpu.matmul %10, %13, %cst_6 {dimension_numbers = #tpu.dot_dimension_numbers<[2], [2], [1], [1], [0, 0, 0, 1, 1, 1], [0], [0]>} : vector<2x8x8xbf16>, vector<2x8x8xbf16>, vector<2x8x8xf32> -> vector<2x8x8xf32>
    "tpu.trace_stop"() : () -> ()
    %cst_7 = arith.constant dense<0xFF800000> : vector<2x8xf32>
    %18 = vector.multi_reduction <maximumf>, %17, %cst_7 [2] : vector<2x8x8xf32> to vector<2x8xf32>
    %19 = vector.shape_cast %18 : vector<2x8xf32> to vector<2x8x1xf32>
    %20 = vector.broadcast %19 : vector<2x8x1xf32> to vector<2x8x8xf32>
    %21 = arith.subf %17, %20 : vector<2x8x8xf32>
    %22 = math.exp %21 : vector<2x8x8xf32>
    %cst_8 = arith.constant dense<0.000000e+00> : vector<2x8xf32>
    %23 = vector.multi_reduction <add>, %22, %cst_8 [2] : vector<2x8x8xf32> to vector<2x8xf32>
    %24 = vector.shape_cast %23 : vector<2x8xf32> to vector<2x8x1xf32>
    %25 = vector.broadcast %24 : vector<2x8x1xf32> to vector<2x8x8xf32>
    %26 = arith.divf %22, %25 : vector<2x8x8xf32>
    %27 = arith.truncf %26 : vector<2x8x8xf32> to vector<2x8x8xbf16>
    "tpu.trace_start"() <{level = 10 : i32, message = "bqk,bkd->bqd"}> : () -> ()
    %cst_9 = arith.constant dense<0.000000e+00> : vector<2x8x8xf32>
    %28 = tpu.matmul %27, %16, %cst_9 {dimension_numbers = #tpu.dot_dimension_numbers<[2], [1], [1], [2], [0, 0, 0, 1, 1, 2], [0], [0]>} : vector<2x8x8xbf16>, vector<2x8x8xbf16>, vector<2x8x8xf32> -> vector<2x8x8xf32>
    "tpu.trace_stop"() : () -> ()
    %29 = vector.shape_cast %28 : vector<2x8x8xf32> to vector<16x8xf32>
    %30 = arith.truncf %29 : vector<16x8xf32> to vector<16x8xbf16>
    %c0_10 = arith.constant 0 : index
    %c0_11 = arith.constant 0 : index
    %c0_12 = arith.constant 0 : index
    %31 = vector.load %arg3[%c0_10, %c0_11, %c0_12] : memref<4x8x32xbf16, #tpu.memory_space<vmem>>, vector<1x8x32xbf16>
    %32 = vector.shape_cast %31 : vector<1x8x32xbf16> to vector<8x32xbf16>
    %cst_13 = arith.constant dense<0.000000e+00> : vector<16x32xf32>
    %33 = tpu.matmul %30, %32, %cst_13 {dimension_numbers = #tpu.dot_dimension_numbers<[1], [0], [0], [1], [0, 0, 1, 1], [], []>} : vector<16x8xbf16>, vector<8x32xbf16>, vector<16x32xf32> -> vector<16x32xf32>
    %34 = arith.addf %7, %33 : vector<16x32xf32>
    %35 = vector.extract_strided_slice %6 {offsets = [0, 8], sizes = [16, 8], strides = [1, 1]} : vector<16x96xf32> to vector<16x8xf32>
    %36 = vector.shape_cast %35 : vector<16x8xf32> to vector<2x8x8xf32>
    %37 = arith.truncf %36 : vector<2x8x8xf32> to vector<2x8x8xbf16>
    %38 = vector.extract_strided_slice %6 {offsets = [0, 40], sizes = [16, 8], strides = [1, 1]} : vector<16x96xf32> to vector<16x8xf32>
    %39 = vector.shape_cast %38 : vector<16x8xf32> to vector<2x8x8xf32>
    %40 = arith.truncf %39 : vector<2x8x8xf32> to vector<2x8x8xbf16>
    %41 = vector.extract_strided_slice %6 {offsets = [0, 72], sizes = [16, 8], strides = [1, 1]} : vector<16x96xf32> to vector<16x8xf32>
    %42 = vector.shape_cast %41 : vector<16x8xf32> to vector<2x8x8xf32>
    %43 = arith.truncf %42 : vector<2x8x8xf32> to vector<2x8x8xbf16>
    "tpu.trace_start"() <{level = 10 : i32, message = "bqd,bkd->bqk"}> : () -> ()
    %cst_14 = arith.constant dense<0.000000e+00> : vector<2x8x8xf32>
    %44 = tpu.matmul %37, %40, %cst_14 {dimension_numbers = #tpu.dot_dimension_numbers<[2], [2], [1], [1], [0, 0, 0, 1, 1, 1], [0], [0]>} : vector<2x8x8xbf16>, vector<2x8x8xbf16>, vector<2x8x8xf32> -> vector<2x8x8xf32>
    "tpu.trace_stop"() : () -> ()
    %cst_15 = arith.constant dense<0xFF800000> : vector<2x8xf32>
    %45 = vector.multi_reduction <maximumf>, %44, %cst_15 [2] : vector<2x8x8xf32> to vector<2x8xf32>
    %46 = vector.shape_cast %45 : vector<2x8xf32> to vector<2x8x1xf32>
    %47 = vector.broadcast %46 : vector<2x8x1xf32> to vector<2x8x8xf32>
    %48 = arith.subf %44, %47 : vector<2x8x8xf32>
    %49 = math.exp %48 : vector<2x8x8xf32>
    %cst_16 = arith.constant dense<0.000000e+00> : vector<2x8xf32>
    %50 = vector.multi_reduction <add>, %49, %cst_16 [2] : vector<2x8x8xf32> to vector<2x8xf32>
    %51 = vector.shape_cast %50 : vector<2x8xf32> to vector<2x8x1xf32>
    %52 = vector.broadcast %51 : vector<2x8x1xf32> to vector<2x8x8xf32>
    %53 = arith.divf %49, %52 : vector<2x8x8xf32>
    %54 = arith.truncf %53 : vector<2x8x8xf32> to vector<2x8x8xbf16>
    "tpu.trace_start"() <{level = 10 : i32, message = "bqk,bkd->bqd"}> : () -> ()
    %cst_17 = arith.constant dense<0.000000e+00> : vector<2x8x8xf32>
    %55 = tpu.matmul %54, %43, %cst_17 {dimension_numbers = #tpu.dot_dimension_numbers<[2], [1], [1], [2], [0, 0, 0, 1, 1, 2], [0], [0]>} : vector<2x8x8xbf16>, vector<2x8x8xbf16>, vector<2x8x8xf32> -> vector<2x8x8xf32>
    "tpu.trace_stop"() : () -> ()
    %56 = vector.shape_cast %55 : vector<2x8x8xf32> to vector<16x8xf32>
    %57 = arith.truncf %56 : vector<16x8xf32> to vector<16x8xbf16>
    %c1 = arith.constant 1 : index
    %c0_18 = arith.constant 0 : index
    %c0_19 = arith.constant 0 : index
    %58 = vector.load %arg3[%c1, %c0_18, %c0_19] : memref<4x8x32xbf16, #tpu.memory_space<vmem>>, vector<1x8x32xbf16>
    %59 = vector.shape_cast %58 : vector<1x8x32xbf16> to vector<8x32xbf16>
    %cst_20 = arith.constant dense<0.000000e+00> : vector<16x32xf32>
    %60 = tpu.matmul %57, %59, %cst_20 {dimension_numbers = #tpu.dot_dimension_numbers<[1], [0], [0], [1], [0, 0, 1, 1], [], []>} : vector<16x8xbf16>, vector<8x32xbf16>, vector<16x32xf32> -> vector<16x32xf32>
    %61 = arith.addf %34, %60 : vector<16x32xf32>
    %62 = vector.extract_strided_slice %6 {offsets = [0, 16], sizes = [16, 8], strides = [1, 1]} : vector<16x96xf32> to vector<16x8xf32>
    %63 = vector.shape_cast %62 : vector<16x8xf32> to vector<2x8x8xf32>
    %64 = arith.truncf %63 : vector<2x8x8xf32> to vector<2x8x8xbf16>
    %65 = vector.extract_strided_slice %6 {offsets = [0, 48], sizes = [16, 8], strides = [1, 1]} : vector<16x96xf32> to vector<16x8xf32>
    %66 = vector.shape_cast %65 : vector<16x8xf32> to vector<2x8x8xf32>
    %67 = arith.truncf %66 : vector<2x8x8xf32> to vector<2x8x8xbf16>
    %68 = vector.extract_strided_slice %6 {offsets = [0, 80], sizes = [16, 8], strides = [1, 1]} : vector<16x96xf32> to vector<16x8xf32>
    %69 = vector.shape_cast %68 : vector<16x8xf32> to vector<2x8x8xf32>
    %70 = arith.truncf %69 : vector<2x8x8xf32> to vector<2x8x8xbf16>
    "tpu.trace_start"() <{level = 10 : i32, message = "bqd,bkd->bqk"}> : () -> ()
    %cst_21 = arith.constant dense<0.000000e+00> : vector<2x8x8xf32>
    %71 = tpu.matmul %64, %67, %cst_21 {dimension_numbers = #tpu.dot_dimension_numbers<[2], [2], [1], [1], [0, 0, 0, 1, 1, 1], [0], [0]>} : vector<2x8x8xbf16>, vector<2x8x8xbf16>, vector<2x8x8xf32> -> vector<2x8x8xf32>
    "tpu.trace_stop"() : () -> ()
    %cst_22 = arith.constant dense<0xFF800000> : vector<2x8xf32>
    %72 = vector.multi_reduction <maximumf>, %71, %cst_22 [2] : vector<2x8x8xf32> to vector<2x8xf32>
    %73 = vector.shape_cast %72 : vector<2x8xf32> to vector<2x8x1xf32>
    %74 = vector.broadcast %73 : vector<2x8x1xf32> to vector<2x8x8xf32>
    %75 = arith.subf %71, %74 : vector<2x8x8xf32>
    %76 = math.exp %75 : vector<2x8x8xf32>
    %cst_23 = arith.constant dense<0.000000e+00> : vector<2x8xf32>
    %77 = vector.multi_reduction <add>, %76, %cst_23 [2] : vector<2x8x8xf32> to vector<2x8xf32>
    %78 = vector.shape_cast %77 : vector<2x8xf32> to vector<2x8x1xf32>
    %79 = vector.broadcast %78 : vector<2x8x1xf32> to vector<2x8x8xf32>
    %80 = arith.divf %76, %79 : vector<2x8x8xf32>
    %81 = arith.truncf %80 : vector<2x8x8xf32> to vector<2x8x8xbf16>
    "tpu.trace_start"() <{level = 10 : i32, message = "bqk,bkd->bqd"}> : () -> ()
    %cst_24 = arith.constant dense<0.000000e+00> : vector<2x8x8xf32>
    %82 = tpu.matmul %81, %70, %cst_24 {dimension_numbers = #tpu.dot_dimension_numbers<[2], [1], [1], [2], [0, 0, 0, 1, 1, 2], [0], [0]>} : vector<2x8x8xbf16>, vector<2x8x8xbf16>, vector<2x8x8xf32> -> vector<2x8x8xf32>
    "tpu.trace_stop"() : () -> ()
    %83 = vector.shape_cast %82 : vector<2x8x8xf32> to vector<16x8xf32>
    %84 = arith.truncf %83 : vector<16x8xf32> to vector<16x8xbf16>
    %c2 = arith.constant 2 : index
    %c0_25 = arith.constant 0 : index
    %c0_26 = arith.constant 0 : index
    %85 = vector.load %arg3[%c2, %c0_25, %c0_26] : memref<4x8x32xbf16, #tpu.memory_space<vmem>>, vector<1x8x32xbf16>
    %86 = vector.shape_cast %85 : vector<1x8x32xbf16> to vector<8x32xbf16>
    %cst_27 = arith.constant dense<0.000000e+00> : vector<16x32xf32>
    %87 = tpu.matmul %84, %86, %cst_27 {dimension_numbers = #tpu.dot_dimension_numbers<[1], [0], [0], [1], [0, 0, 1, 1], [], []>} : vector<16x8xbf16>, vector<8x32xbf16>, vector<16x32xf32> -> vector<16x32xf32>
    %88 = arith.addf %61, %87 : vector<16x32xf32>
    %89 = vector.extract_strided_slice %6 {offsets = [0, 24], sizes = [16, 8], strides = [1, 1]} : vector<16x96xf32> to vector<16x8xf32>
    %90 = vector.shape_cast %89 : vector<16x8xf32> to vector<2x8x8xf32>
    %91 = arith.truncf %90 : vector<2x8x8xf32> to vector<2x8x8xbf16>
    %92 = vector.extract_strided_slice %6 {offsets = [0, 56], sizes = [16, 8], strides = [1, 1]} : vector<16x96xf32> to vector<16x8xf32>
    %93 = vector.shape_cast %92 : vector<16x8xf32> to vector<2x8x8xf32>
    %94 = arith.truncf %93 : vector<2x8x8xf32> to vector<2x8x8xbf16>
    %95 = vector.extract_strided_slice %6 {offsets = [0, 88], sizes = [16, 8], strides = [1, 1]} : vector<16x96xf32> to vector<16x8xf32>
    %96 = vector.shape_cast %95 : vector<16x8xf32> to vector<2x8x8xf32>
    %97 = arith.truncf %96 : vector<2x8x8xf32> to vector<2x8x8xbf16>
    "tpu.trace_start"() <{level = 10 : i32, message = "bqd,bkd->bqk"}> : () -> ()
    %cst_28 = arith.constant dense<0.000000e+00> : vector<2x8x8xf32>
    %98 = tpu.matmul %91, %94, %cst_28 {dimension_numbers = #tpu.dot_dimension_numbers<[2], [2], [1], [1], [0, 0, 0, 1, 1, 1], [0], [0]>} : vector<2x8x8xbf16>, vector<2x8x8xbf16>, vector<2x8x8xf32> -> vector<2x8x8xf32>
    "tpu.trace_stop"() : () -> ()
    %cst_29 = arith.constant dense<0xFF800000> : vector<2x8xf32>
    %99 = vector.multi_reduction <maximumf>, %98, %cst_29 [2] : vector<2x8x8xf32> to vector<2x8xf32>
    %100 = vector.shape_cast %99 : vector<2x8xf32> to vector<2x8x1xf32>
    %101 = vector.broadcast %100 : vector<2x8x1xf32> to vector<2x8x8xf32>
    %102 = arith.subf %98, %101 : vector<2x8x8xf32>
    %103 = math.exp %102 : vector<2x8x8xf32>
    %cst_30 = arith.constant dense<0.000000e+00> : vector<2x8xf32>
    %104 = vector.multi_reduction <add>, %103, %cst_30 [2] : vector<2x8x8xf32> to vector<2x8xf32>
    %105 = vector.shape_cast %104 : vector<2x8xf32> to vector<2x8x1xf32>
    %106 = vector.broadcast %105 : vector<2x8x1xf32> to vector<2x8x8xf32>
    %107 = arith.divf %103, %106 : vector<2x8x8xf32>
    %108 = arith.truncf %107 : vector<2x8x8xf32> to vector<2x8x8xbf16>
    "tpu.trace_start"() <{level = 10 : i32, message = "bqk,bkd->bqd"}> : () -> ()
    %cst_31 = arith.constant dense<0.000000e+00> : vector<2x8x8xf32>
    %109 = tpu.matmul %108, %97, %cst_31 {dimension_numbers = #tpu.dot_dimension_numbers<[2], [1], [1], [2], [0, 0, 0, 1, 1, 2], [0], [0]>} : vector<2x8x8xbf16>, vector<2x8x8xbf16>, vector<2x8x8xf32> -> vector<2x8x8xf32>
    "tpu.trace_stop"() : () -> ()
    %110 = vector.shape_cast %109 : vector<2x8x8xf32> to vector<16x8xf32>
    %111 = arith.truncf %110 : vector<16x8xf32> to vector<16x8xbf16>
    %c3 = arith.constant 3 : index
    %c0_32 = arith.constant 0 : index
    %c0_33 = arith.constant 0 : index
    %112 = vector.load %arg3[%c3, %c0_32, %c0_33] : memref<4x8x32xbf16, #tpu.memory_space<vmem>>, vector<1x8x32xbf16>
    %113 = vector.shape_cast %112 : vector<1x8x32xbf16> to vector<8x32xbf16>
    %cst_34 = arith.constant dense<0.000000e+00> : vector<16x32xf32>
    %114 = tpu.matmul %111, %113, %cst_34 {dimension_numbers = #tpu.dot_dimension_numbers<[1], [0], [0], [1], [0, 0, 1, 1], [], []>} : vector<16x8xbf16>, vector<8x32xbf16>, vector<16x32xf32> -> vector<16x32xf32>
    %115 = arith.addf %88, %114 : vector<16x32xf32>
    %116 = vector.shape_cast %26 : vector<2x8x8xf32> to vector<2x1x8x8xf32>
    %117 = vector.shape_cast %53 : vector<2x8x8xf32> to vector<2x1x8x8xf32>
    %118 = vector.shape_cast %80 : vector<2x8x8xf32> to vector<2x1x8x8xf32>
    %119 = vector.shape_cast %107 : vector<2x8x8xf32> to vector<2x1x8x8xf32>
    %120 = tpu.concatenate %116, %117, %118, %119 in 1 : vector<2x1x8x8xf32>, vector<2x1x8x8xf32>, vector<2x1x8x8xf32>, vector<2x1x8x8xf32> -> vector<2x4x8x8xf32>
    %c0_35 = arith.constant 0 : index
    %c0_36 = arith.constant 0 : index
    %c0_37 = arith.constant 0 : index
    %c0_38 = arith.constant 0 : index
    %121 = vector.load %arg6[%c0_35, %c0_36, %c0_37, %c0_38] : memref<2x4x8x8xf32, #tpu.memory_space<vmem>>, vector<2x4x8x8xf32>
    tpu.vector_store %arg6[%c0_35, %c0_36, %c0_37, %c0_38], %120 {strides = array<i32>} : memref<2x4x8x8xf32, #tpu.memory_space<vmem>>, vector<2x4x8x8xf32>,
    %c0_39 = arith.constant 0 : index
    %c0_40 = arith.constant 0 : index
    %122 = vector.load %arg4[%c0_39, %c0_40] : memref<1x32xf32, #tpu.memory_space<vmem>>, vector<1x32xf32>
    %123 = vector.broadcast %122 : vector<1x32xf32> to vector<16x32xf32>
    %124 = arith.addf %115, %123 : vector<16x32xf32>
    %c0_41 = arith.constant 0 : index
    %c0_42 = arith.constant 0 : index
    %125 = vector.load %arg5[%c0_41, %c0_42] : memref<16x32xf32, #tpu.memory_space<vmem>>, vector<16x32xf32>
    tpu.vector_store %arg5[%c0_41, %c0_42], %124 {strides = array<i32>} : memref<16x32xf32, #tpu.memory_space<vmem>>, vector<16x32xf32>,
    return
  }
}

</mosaic_0001>

<llo_original>
// kernel: tpu_custom_call.1
$region0: #{tpu_custom_call.1}
  #allocation0 [shape = 'u32[]', space=smem, size = 0x4, offset = 0x4, fixed_abs, tag = 'smem constant byte address 0x4 - core index']
  #allocation1 [shape = 'u32[72,128]{1,0:T(1,128)}', space=vmem, size = 0x9000, scoped, tag = 'internal scratch']
  %s0 = inlined_call_operand.hbm [shape: f32[16,32], index: 0, kind: input, shape index: {}]
  %s1 = inlined_call_operand.hbm [shape: bf16[32,96], index: 1, kind: input, shape index: {}]
  %s2 = inlined_call_operand.vmem [shape: f32[1,96], index: 2, kind: input, shape index: {}]
  %s3 = inlined_call_operand.hbm [shape: bf16[4,8,32], index: 3, kind: input, shape index: {}]
  %s4 = inlined_call_operand.vmem [shape: f32[1,32], index: 4, kind: input, shape index: {}]
  %s5 = inlined_call_operand.hbm [shape: f32[16,32], index: 5, kind: output, shape index: {0}]
  %s6 = inlined_call_operand.hbm [shape: f32[2,4,8,8], index: 6, kind: output, shape index: {1}]
  %7 = xla_tuple %s5, %s6
  %s8 = sld [smem:[#allocation0]]
  $region50: #{tpu_custom_call.1} parent=0
    _
  %s10 = ssub.s32 1, %s8
  %s11 = scalar_select 0, %s10, %s8
  $region1: #{tpu_custom_call.1} parent=0
    #allocation2 [shape = 'u8[8192]{0}', space=vmem, size = 0x2000, scoped, tag = 'input window, operand 0, single buffered']
    #allocation3 [shape = 's32[1]{0}', space=sflag, size = 0x4, scoped, tag = 'scoped memory for tpu_custom_call.1']
    #allocation4 [shape = 's32[1]{0}', space=sflag, size = 0x4, scoped, tag = 'scoped memory for tpu_custom_call.1']
    #allocation5 [shape = 'u8[8192]{0}', space=vmem, size = 0x2000, scoped, tag = 'input window, operand 1, single buffered']
    #allocation6 [shape = 's32[1]{0}', space=sflag, size = 0x4, scoped, tag = 'scoped memory for tpu_custom_call.1']
    #allocation7 [shape = 'u8[8192]{0}', space=vmem, size = 0x2000, scoped, tag = 'input window, operand 3, single buffered']
    #allocation8 [shape = 'u8[8192]{0}', space=vmem, size = 0x2000, scoped, tag = 'output window, operand 0, single buffered']
    #allocation9 [shape = 'u8[32768]{0}', space=vmem, size = 0x8000, scoped, tag = 'output window, operand 1, single buffered']
    #allocation10 [shape = 's32[1]{0}', space=sflag, size = 0x4, scoped, tag = 'scoped memory for tpu_custom_call.1']
    %12 = vsyncpa [#allocation3], 0
    %13 = vsyncpa [#allocation6], 0
    %14 = vsyncpa [#allocation4], 0
    %15 = vsyncpa [#allocation10], 0
    // Predicated region
    $region2: #{tpu_custom_call.1} parent=1 // pred_check
      _
    $region3: #{tpu_custom_call.1} parent=1 // pred_check_branch
      %17 = sbr.rel (0) target = $region5
    $region4: #{tpu_custom_call.1} parent=1 // pred_region
      %19 = vsyncadd [#allocation3], 0
      %s20 = sshll.u32 %s0, 4
      %s21 = int_to_ptr.hbm [resolvable:$true] %s20
      %s22 = sshll.u32 [#allocation2], 4
      %s23 = int_to_ptr.vmem [resolvable:$true] %s22
      %28 = dma.hbm_to_vmem [thread:$0]  %s21, 256, %s23, [#allocation3], 128, 128, 8
    $region5: #{tpu_custom_call.1} parent=1 // pred_fallthru
      _
    // Predicated region
    $region6: #{tpu_custom_call.1} parent=1 // pred_check
      _
    $region7: #{tpu_custom_call.1} parent=1 // pred_check_branch
      %30 = sbr.rel (0) target = $region9
    $region8: #{tpu_custom_call.1} parent=1 // pred_region
      %32 = vsyncadd [#allocation6], 0
      %s33 = sshll.u32 %s1, 4
      %s34 = int_to_ptr.hbm [resolvable:$true] %s33
      %s35 = sshll.u32 [#allocation5], 4
      %s36 = int_to_ptr.vmem [resolvable:$true] %s35
      %41 = dma.hbm_to_vmem [thread:$0]  %s34, 256, %s36, [#allocation6], 64, 64, 4
    $region9: #{tpu_custom_call.1} parent=1 // pred_fallthru
      _
    // Predicated region
    $region10: #{tpu_custom_call.1} parent=1 // pred_check
      _
    $region11: #{tpu_custom_call.1} parent=1 // pred_check_branch
      %43 = sbr.rel (0) target = $region13
    $region12: #{tpu_custom_call.1} parent=1 // pred_region
      _
    $region13: #{tpu_custom_call.1} parent=1 // pred_fallthru
      _
    // Predicated region
    $region14: #{tpu_custom_call.1} parent=1 // pred_check
      _
    $region15: #{tpu_custom_call.1} parent=1 // pred_check_branch
      %45 = sbr.rel (0) target = $region17
    $region16: #{tpu_custom_call.1} parent=1 // pred_region
      %47 = vsyncadd [#allocation6], 0
      %s48 = sshll.u32 %s3, 4
      %s49 = int_to_ptr.hbm [resolvable:$true] %s48
      %s50 = sshll.u32 [#allocation7], 4
      %s51 = int_to_ptr.vmem [resolvable:$true] %s50
      %56 = dma.hbm_to_vmem [thread:$0]  %s49, 256, %s51, [#allocation6], 64, 64, 4
    $region17: #{tpu_custom_call.1} parent=1 // pred_fallthru
      _
    // Predicated region
    $region18: #{tpu_custom_call.1} parent=1 // pred_check
      _
    $region19: #{tpu_custom_call.1} parent=1 // pred_check_branch
      %58 = sbr.rel (0) target = $region21
    $region20: #{tpu_custom_call.1} parent=1 // pred_region
      _
    $region21: #{tpu_custom_call.1} parent=1 // pred_fallthru
      _
    // Predicated region
    $region22: #{tpu_custom_call.1} parent=1 // pred_check
      _
    $region23: #{tpu_custom_call.1} parent=1 // pred_check_branch
      %60 = sbr.rel (0) target = $region25
    $region24: #{tpu_custom_call.1} parent=1 // pred_region
      %62 = dma.done [#allocation3], 256
    $region25: #{tpu_custom_call.1} parent=1 // pred_fallthru
      _
    // Predicated region
    $region26: #{tpu_custom_call.1} parent=1 // pred_check
      _
    $region27: #{tpu_custom_call.1} parent=1 // pred_check_branch
      %64 = sbr.rel (0) target = $region29
    $region28: #{tpu_custom_call.1} parent=1 // pred_region
      %66 = dma.done [#allocation6], 256
    $region29: #{tpu_custom_call.1} parent=1 // pred_fallthru
      _
    // Predicated region
    $region30: #{tpu_custom_call.1} parent=1 // pred_check
      _
    $region31: #{tpu_custom_call.1} parent=1 // pred_check_branch
      %68 = sbr.rel (0) target = $region33
    $region32: #{tpu_custom_call.1} parent=1 // pred_region
      %70 = dma.done [#allocation6], 256
    $region33: #{tpu_custom_call.1} parent=1 // pred_fallthru
      _
    %v72 = vld [vmem:[#allocation2] sm:$0xff]
    %v73 = vld [vmem:[#allocation2 + $0x8] sm:$0xff]
    %v74 = vpack.c.bf16 %v73, %v72
    %v75 = vld [vmem:[#allocation5] sm:$0xf]
    %v76 = vld [vmem:[#allocation5 + $0x4] sm:$0xf]
    %v77 = vld [vmem:[#allocation5 + $0x8] sm:$0xf]
    %v78 = vld [vmem:[#allocation5 + $0xc] sm:$0xf]
    %v79 = vld [vmem:[%s2] sm:$0x1]
    %v81 = vperm.slane %v79, 0
    %v87 = vunpack.c.l.b16 %v75
    %v88 = vunpack.c.l.b16 %v76
    %v89 = vunpack.c.l.b16 %v77
    %v90 = vunpack.c.l.b16 %v78
    %v91 = vpack.c.b16 %v88, %v87
    %v92 = vpack.c.b16 %v90, %v89
    %vm95 = vcmask 261120
    %v97 = vsel %vm95, %v74, 0
    %99 = vmatpush.bf16.msra.mxu0 0
    %100 = vmatpush.bf16.msra.mxu0 0
    %101 = vmatpush.bf16.msra.mxu0 0
    %102 = vmatpush.bf16.msra.mxu0 0
    %103 = vmatpush.bf16.msra.mxu0 0
    %104 = vmatpush.bf16.msra.mxu0 0
    %105 = vmatpush.bf16.msra.mxu0 %v92
    %106 = vmatpush.bf16.msra.mxu0 %v91
    %107 = vmatmul.bf16.gmra.mxu0 %v97
    %v108 = vpop.f32.mrf.mxu0
    %v109 = vadd.f32 %v81, %v108
    %v110 = vpop.f32.mrf.mxu0
    %v111 = vadd.f32 %v81, %v110
    %112 = vdwg.mxu0
    %v113 = vpack.c.bf16 %v109, %v109
    %v114 = vpack.c.bf16 %v111, %v111
    %v116 = vunpack.c.l.b16 %v113
    %v117 = vpack.c.b16 %v116, %v116
    %118 = vrot.lane.b32.xlu0 %v117, 96
    %v119 = vpop.permute.xlu0 %118
    %vm120 = vcmask 64512
    %v122 = vsel %vm120, %v113, 0
    %v125 = vsel %vm120, %v119, 0
    %127 = vmatpush.bf16.xpose.msra.mxu0 0
    %128 = vmatpush.bf16.xpose.msra.mxu0 0
    %129 = vmatpush.bf16.xpose.msra.mxu0 0
    %130 = vmatpush.bf16.xpose.msra.mxu0 0
    %131 = vmatpush.bf16.xpose.msra.mxu0 0
    %132 = vmatpush.bf16.xpose.msra.mxu0 0
    %133 = vmatpush.bf16.xpose.msra.mxu0 0
    %134 = vmatpush.bf16.xpose.msra.mxu0 %v125
    %135 = vmatmul.bf16.gmra.mxu0 %v122
    %v136 = vpop.f32.mrf.mxu0
    %v137 = vadd.f32 0.0, %v136
    %v138 = vpop.f32.mrf.mxu0
    %139 = vdwg.mxu0
    %v141 = vunpack.c.l.b16 %v114
    %v142 = vpack.c.b16 %v141, %v141
    %143 = vrot.lane.b32.xlu0 %v142, 96
    %v144 = vpop.permute.xlu0 %143
    %v146 = vsel %vm120, %v114, 0
    %v149 = vsel %vm120, %v144, 0
    %151 = vmatpush.bf16.xpose.msra.mxu0 0
    %152 = vmatpush.bf16.xpose.msra.mxu0 0
    %153 = vmatpush.bf16.xpose.msra.mxu0 0
    %154 = vmatpush.bf16.xpose.msra.mxu0 0
    %155 = vmatpush.bf16.xpose.msra.mxu0 0
    %156 = vmatpush.bf16.xpose.msra.mxu0 0
    %157 = vmatpush.bf16.xpose.msra.mxu0 0
    %158 = vmatpush.bf16.xpose.msra.mxu0 %v149
    %159 = vmatmul.bf16.gmra.mxu0 %v146
    %v160 = vpop.f32.mrf.mxu0
    %v161 = vadd.f32 0.0, %v160
    %v162 = vpop.f32.mrf.mxu0
    %163 = vdwg.mxu0
    %v164 = vsel %vm120, %v137, -inf
    %165 = vmax.xlane.f32.xlu0 %v164
    %v166 = vpop.xlane.xlu0 %165
    %v167 = vsel %vm120, %v161, -inf
    %168 = vmax.xlane.f32.xlu0 %v167
    %v169 = vpop.xlane.xlu0 %168
    %v170 = vsub.f32 %v137, %v166
    %v171 = vsub.f32 %v161, %v169
    %v172 = vmul.f32 %v170, 1.442695
    %v173 = vpow.pop %v172
    %v174 = vmul.f32 %v171, 1.442695
    %v175 = vpow.pop %v174
    %v176 = vsel %vm120, %v173, 0.0
    %177 = vadd.xlane.f32.xlu0 %v176
    %v178 = vpop.xlane.xlu0 %177
    %v179 = vsel %vm120, %v175, 0.0
    %180 = vadd.xlane.f32.xlu0 %v179
    %v181 = vpop.xlane.xlu0 %180
    %v182 = vrcp.pop %v178
    %v183 = vmul.f32 %v178, %v182
    %v184 = vsub.f32 1.0, %v183
    %v185 = vmul.f32 %v182, %v184
    %v186 = vadd.f32 %v182, %v185
    %vm187 = vweird.f32 %v178
    %vm188 = vweird.f32 %v182
    %vm189 = vmor %vm187, %vm188
    %v190 = vsel %vm189, %v182, %v186
    %v191 = vand.u32 2147483647, %v178
    %vm192 = vcmp.eq.f32.partialorder %v191, 8.507059e+37
    %v193 = vand.u32 %v178, 2147483648
    %v194 = vor.u32 1.1754944e-38, %v193
    %v195 = vsel %vm192, %v194, %v190
    %v196 = vmul.f32 %v173, %v195
    %v197 = vrcp.pop %v181
    %v198 = vmul.f32 %v181, %v197
    %v199 = vsub.f32 1.0, %v198
    %v200 = vmul.f32 %v197, %v199
    %v201 = vadd.f32 %v197, %v200
    %vm202 = vweird.f32 %v181
    %vm203 = vweird.f32 %v197
    %vm204 = vmor %vm202, %vm203
    %v205 = vsel %vm204, %v197, %v201
    %v206 = vand.u32 2147483647, %v181
    %vm207 = vcmp.eq.f32.partialorder %v206, 8.507059e+37
    %v208 = vand.u32 %v181, 2147483648
    %v209 = vor.u32 1.1754944e-38, %v208
    %v210 = vsel %vm207, %v209, %v205
    %v211 = vmul.f32 %v175, %v210
    %v212 = vpack.c.bf16 %v196, %v196
    %v213 = vpack.c.bf16 %v211, %v211
    %214 = vrot.lane.b32.xlu0 %v117, 64
    %v215 = vpop.permute.xlu0 %214
    %v217 = vsel %vm120, %v212, 0
    %vm219 = vcmask 1043456
    %v221 = vsel %vm219, %v215, 0
    %223 = vmatpush.bf16.msra.mxu0 0
    %224 = vmatpush.bf16.msra.mxu0 0
    %225 = vmatpush.bf16.msra.mxu0 0
    %226 = vmatpush.bf16.msra.mxu0 0
    %227 = vmatpush.bf16.msra.mxu0 0
    %228 = vmatpush.bf16.msra.mxu0 0
    %229 = vmatpush.bf16.msra.mxu0 0
    %230 = vmatpush.bf16.msra.mxu0 %v221
    %231 = vmatmul.bf16.gmra.mxu0 %v217
    %v232 = vpop.f32.mrf.mxu0
    %v233 = vadd.f32 0.0, %v232
    %v234 = vpop.f32.mrf.mxu0
    %235 = vdwg.mxu0
    %236 = vrot.lane.b32.xlu0 %v142, 64
    %v237 = vpop.permute.xlu0 %236
    %v239 = vsel %vm120, %v213, 0
    %v242 = vsel %vm219, %v237, 0
    %244 = vmatpush.bf16.msra.mxu0 0
    %245 = vmatpush.bf16.msra.mxu0 0
    %246 = vmatpush.bf16.msra.mxu0 0
    %247 = vmatpush.bf16.msra.mxu0 0
    %248 = vmatpush.bf16.msra.mxu0 0
    %249 = vmatpush.bf16.msra.mxu0 0
    %250 = vmatpush.bf16.msra.mxu0 0
    %251 = vmatpush.bf16.msra.mxu0 %v242
    %252 = vmatmul.bf16.gmra.mxu0 %v239
    %v253 = vpop.f32.mrf.mxu0
    %v254 = vadd.f32 0.0, %v253
    %v255 = vpop.f32.mrf.mxu0
    %256 = vdwg.mxu0
    %v257 = vpack.c.bf16 %v254, %v233
    %v258 = vld [vmem:[#allocation7] sm:$0xf]
    %259 = vrot.lane.b32.xlu0 %v117, 120
    %v260 = vpop.permute.xlu0 %259
    %261 = vrot.lane.b32.xlu0 %v117, 88
    %v262 = vpop.permute.xlu0 %261
    %v264 = vsel %vm120, %v260, 0
    %v267 = vsel %vm120, %v262, 0
    %269 = vmatpush.bf16.xpose.msra.mxu0 0
    %270 = vmatpush.bf16.xpose.msra.mxu0 0
    %271 = vmatpush.bf16.xpose.msra.mxu0 0
    %272 = vmatpush.bf16.xpose.msra.mxu0 0
    %273 = vmatpush.bf16.xpose.msra.mxu0 0
    %274 = vmatpush.bf16.xpose.msra.mxu0 0
    %275 = vmatpush.bf16.xpose.msra.mxu0 0
    %276 = vmatpush.bf16.xpose.msra.mxu0 %v267
    %277 = vmatmul.bf16.gmra.mxu0 %v264
    %v278 = vpop.f32.mrf.mxu0
    %v279 = vadd.f32 0.0, %v278
    %v280 = vpop.f32.mrf.mxu0
    %281 = vdwg.mxu0
    %282 = vrot.lane.b32.xlu0 %v142, 120
    %v283 = vpop.permute.xlu0 %282
    %284 = vrot.lane.b32.xlu0 %v142, 88
    %v285 = vpop.permute.xlu0 %284
    %v287 = vsel %vm120, %v283, 0
    %v290 = vsel %vm120, %v285, 0
    %292 = vmatpush.bf16.xpose.msra.mxu0 0
    %293 = vmatpush.bf16.xpose.msra.mxu0 0
    %294 = vmatpush.bf16.xpose.msra.mxu0 0
    %295 = vmatpush.bf16.xpose.msra.mxu0 0
    %296 = vmatpush.bf16.xpose.msra.mxu0 0
    %297 = vmatpush.bf16.xpose.msra.mxu0 0
    %298 = vmatpush.bf16.xpose.msra.mxu0 0
    %299 = vmatpush.bf16.xpose.msra.mxu0 %v290
    %300 = vmatmul.bf16.gmra.mxu0 %v287
    %v301 = vpop.f32.mrf.mxu0
    %v302 = vadd.f32 0.0, %v301
    %v303 = vpop.f32.mrf.mxu0
    %304 = vdwg.mxu0
    %v305 = vsel %vm120, %v279, -inf
    %306 = vmax.xlane.f32.xlu0 %v305
    %v307 = vpop.xlane.xlu0 %306
    %v308 = vsel %vm120, %v302, -inf
    %309 = vmax.xlane.f32.xlu0 %v308
    %v310 = vpop.xlane.xlu0 %309
    %v311 = vsub.f32 %v279, %v307
    %v312 = vsub.f32 %v302, %v310
    %v313 = vmul.f32 %v311, 1.442695
    %v314 = vpow.pop %v313
    %v315 = vmul.f32 %v312, 1.442695
    %v316 = vpow.pop %v315
    %v317 = vsel %vm120, %v314, 0.0
    %318 = vadd.xlane.f32.xlu0 %v317
    %v319 = vpop.xlane.xlu0 %318
    %v320 = vsel %vm120, %v316, 0.0
    %321 = vadd.xlane.f32.xlu0 %v320
    %v322 = vpop.xlane.xlu0 %321
    %v323 = vrcp.pop %v319
    %v324 = vmul.f32 %v319, %v323
    %v325 = vsub.f32 1.0, %v324
    %v326 = vmul.f32 %v323, %v325
    %v327 = vadd.f32 %v323, %v326
    %vm328 = vweird.f32 %v319
    %vm329 = vweird.f32 %v323
    %vm330 = vmor %vm328, %vm329
    %v331 = vsel %vm330, %v323, %v327
    %v332 = vand.u32 2147483647, %v319
    %vm333 = vcmp.eq.f32.partialorder %v332, 8.507059e+37
    %v334 = vand.u32 %v319, 2147483648
    %v335 = vor.u32 1.1754944e-38, %v334
    %v336 = vsel %vm333, %v335, %v331
    %v337 = vmul.f32 %v314, %v336
    %v338 = vrcp.pop %v322
    %v339 = vmul.f32 %v322, %v338
    %v340 = vsub.f32 1.0, %v339
    %v341 = vmul.f32 %v338, %v340
    %v342 = vadd.f32 %v338, %v341
    %vm343 = vweird.f32 %v322
    %vm344 = vweird.f32 %v338
    %vm345 = vmor %vm343, %vm344
    %v346 = vsel %vm345, %v338, %v342
    %v347 = vand.u32 2147483647, %v322
    %vm348 = vcmp.eq.f32.partialorder %v347, 8.507059e+37
    %v349 = vand.u32 %v322, 2147483648
    %v350 = vor.u32 1.1754944e-38, %v349
    %v351 = vsel %vm348, %v350, %v346
    %v352 = vmul.f32 %v316, %v351
    %v353 = vpack.c.bf16 %v337, %v337
    %v354 = vpack.c.bf16 %v352, %v352
    %355 = vrot.lane.b32.xlu0 %v117, 56
    %v356 = vpop.permute.xlu0 %355
    %v358 = vsel %vm120, %v353, 0
    %v361 = vsel %vm219, %v356, 0
    %363 = vmatpush.bf16.msra.mxu0 0
    %364 = vmatpush.bf16.msra.mxu0 0
    %365 = vmatpush.bf16.msra.mxu0 0
    %366 = vmatpush.bf16.msra.mxu0 0
    %367 = vmatpush.bf16.msra.mxu0 0
    %368 = vmatpush.bf16.msra.mxu0 0
    %369 = vmatpush.bf16.msra.mxu0 0
    %370 = vmatpush.bf16.msra.mxu0 %v361
    %371 = vmatmul.bf16.gmra.mxu0 %v358
    %v372 = vpop.f32.mrf.mxu0
    %v373 = vadd.f32 0.0, %v372
    %v374 = vpop.f32.mrf.mxu0
    %375 = vdwg.mxu0
    %376 = vrot.lane.b32.xlu0 %v142, 56
    %v377 = vpop.permute.xlu0 %376
    %v379 = vsel %vm120, %v354, 0
    %v382 = vsel %vm219, %v377, 0
    %384 = vmatpush.bf16.msra.mxu0 0
    %385 = vmatpush.bf16.msra.mxu0 0
    %386 = vmatpush.bf16.msra.mxu0 0
    %387 = vmatpush.bf16.msra.mxu0 0
    %388 = vmatpush.bf16.msra.mxu0 0
    %389 = vmatpush.bf16.msra.mxu0 0
    %390 = vmatpush.bf16.msra.mxu0 0
    %391 = vmatpush.bf16.msra.mxu0 %v382
    %392 = vmatmul.bf16.gmra.mxu0 %v379
    %v393 = vpop.f32.mrf.mxu0
    %v394 = vadd.f32 0.0, %v393
    %v395 = vpop.f32.mrf.mxu0
    %396 = vdwg.mxu0
    %v397 = vpack.c.bf16 %v394, %v373
    %s398 = scalar_lea.vmem [#allocation7], 4
    %v399 = vld [vmem:[%s398] sm:$0xf]
    %v401 = vsel %vm120, %v397, 0
    %v404 = vsel %vm219, %v399, 0
    %406 = vmatpush.bf16.msra.mxu0 0
    %407 = vmatpush.bf16.msra.mxu0 0
    %408 = vmatpush.bf16.msra.mxu0 0
    %409 = vmatpush.bf16.msra.mxu0 0
    %410 = vmatpush.bf16.msra.mxu0 0
    %411 = vmatpush.bf16.msra.mxu0 0
    %412 = vmatpush.bf16.msra.mxu0 0
    %413 = vmatpush.bf16.msra.mxu0 %v404
    %414 = vmatmul.bf16.gmra.mxu0 %v401
    %v415 = vpop.f32.mrf.mxu0
    %v416 = vadd.f32 0.0, %v415
    %v417 = vpop.f32.mrf.mxu0
    %v418 = vadd.f32 0.0, %v417
    %419 = vdwg.mxu0
    %v421 = vsel %vm120, %v257, 0
    %v424 = vsel %vm219, %v258, 0
    %426 = vmatpush.bf16.msra.mxu0 0
    %427 = vmatpush.bf16.msra.mxu0 0
    %428 = vmatpush.bf16.msra.mxu0 0
    %429 = vmatpush.bf16.msra.mxu0 0
    %430 = vmatpush.bf16.msra.mxu0 0
    %431 = vmatpush.bf16.msra.mxu0 0
    %432 = vmatpush.bf16.msra.mxu0 0
    %433 = vmatpush.bf16.msra.mxu0 %v424
    %434 = vmatmul.bf16.gmra.mxu0 %v421
    %v435 = vpop.f32.mrf.mxu0
    %v436 = vadd.f32 %v416, %v435
    %v437 = vpop.f32.mrf.mxu0
    %v438 = vadd.f32 %v418, %v437
    %439 = vdwg.mxu0
    %440 = vrot.lane.b32.xlu0 %v117, 112
    %v441 = vpop.permute.xlu0 %440
    %442 = vrot.lane.b32.xlu0 %v117, 80
    %v443 = vpop.permute.xlu0 %442
    %v445 = vsel %vm120, %v441, 0
    %v448 = vsel %vm120, %v443, 0
    %450 = vmatpush.bf16.xpose.msra.mxu0 0
    %451 = vmatpush.bf16.xpose.msra.mxu0 0
    %452 = vmatpush.bf16.xpose.msra.mxu0 0
    %453 = vmatpush.bf16.xpose.msra.mxu0 0
    %454 = vmatpush.bf16.xpose.msra.mxu0 0
    %455 = vmatpush.bf16.xpose.msra.mxu0 0
    %456 = vmatpush.bf16.xpose.msra.mxu0 0
    %457 = vmatpush.bf16.xpose.msra.mxu0 %v448
    %458 = vmatmul.bf16.gmra.mxu0 %v445
    %v459 = vpop.f32.mrf.mxu0
    %v460 = vadd.f32 0.0, %v459
    %v461 = vpop.f32.mrf.mxu0
    %462 = vdwg.mxu0
    %463 = vrot.lane.b32.xlu0 %v142, 112
    %v464 = vpop.permute.xlu0 %463
    %465 = vrot.lane.b32.xlu0 %v142, 80
    %v466 = vpop.permute.xlu0 %465
    %v468 = vsel %vm120, %v464, 0
    %v471 = vsel %vm120, %v466, 0
    %473 = vmatpush.bf16.xpose.msra.mxu0 0
    %474 = vmatpush.bf16.xpose.msra.mxu0 0
    %475 = vmatpush.bf16.xpose.msra.mxu0 0
    %476 = vmatpush.bf16.xpose.msra.mxu0 0
    %477 = vmatpush.bf16.xpose.msra.mxu0 0
    %478 = vmatpush.bf16.xpose.msra.mxu0 0
    %479 = vmatpush.bf16.xpose.msra.mxu0 0
    %480 = vmatpush.bf16.xpose.msra.mxu0 %v471
    %481 = vmatmul.bf16.gmra.mxu0 %v468
    %v482 = vpop.f32.mrf.mxu0
    %v483 = vadd.f32 0.0, %v482
    %v484 = vpop.f32.mrf.mxu0
    %485 = vdwg.mxu0
    %v486 = vsel %vm120, %v460, -inf
    %487 = vmax.xlane.f32.xlu0 %v486
    %v488 = vpop.xlane.xlu0 %487
    %v489 = vsel %vm120, %v483, -inf
    %490 = vmax.xlane.f32.xlu0 %v489
    %v491 = vpop.xlane.xlu0 %490
    %v492 = vsub.f32 %v460, %v488
    %v493 = vsub.f32 %v483, %v491
    %v494 = vmul.f32 %v492, 1.442695
    %v495 = vpow.pop %v494
    %v496 = vmul.f32 %v493, 1.442695
    %v497 = vpow.pop %v496
    %v498 = vsel %vm120, %v495, 0.0
    %499 = vadd.xlane.f32.xlu0 %v498
    %v500 = vpop.xlane.xlu0 %499
    %v501 = vsel %vm120, %v497, 0.0
    %502 = vadd.xlane.f32.xlu0 %v501
    %v503 = vpop.xlane.xlu0 %502
    %v504 = vrcp.pop %v500
    %v505 = vmul.f32 %v500, %v504
    %v506 = vsub.f32 1.0, %v505
    %v507 = vmul.f32 %v504, %v506
    %v508 = vadd.f32 %v504, %v507
    %vm509 = vweird.f32 %v500
    %vm510 = vweird.f32 %v504
    %vm511 = vmor %vm509, %vm510
    %v512 = vsel %vm511, %v504, %v508
    %v513 = vand.u32 2147483647, %v500
    %vm514 = vcmp.eq.f32.partialorder %v513, 8.507059e+37
    %v515 = vand.u32 %v500, 2147483648
    %v516 = vor.u32 1.1754944e-38, %v515
    %v517 = vsel %vm514, %v516, %v512
    %v518 = vmul.f32 %v495, %v517
    %v519 = vrcp.pop %v503
    %v520 = vmul.f32 %v503, %v519
    %v521 = vsub.f32 1.0, %v520
    %v522 = vmul.f32 %v519, %v521
    %v523 = vadd.f32 %v519, %v522
    %vm524 = vweird.f32 %v503
    %vm525 = vweird.f32 %v519
    %vm526 = vmor %vm524, %vm525
    %v527 = vsel %vm526, %v519, %v523
    %v528 = vand.u32 2147483647, %v503
    %vm529 = vcmp.eq.f32.partialorder %v528, 8.507059e+37
    %v530 = vand.u32 %v503, 2147483648
    %v531 = vor.u32 1.1754944e-38, %v530
    %v532 = vsel %vm529, %v531, %v527
    %v533 = vmul.f32 %v497, %v532
    %v534 = vpack.c.bf16 %v518, %v518
    %v535 = vpack.c.bf16 %v533, %v533
    %536 = vrot.lane.b32.xlu0 %v117, 48
    %v537 = vpop.permute.xlu0 %536
    %v539 = vsel %vm120, %v534, 0
    %v542 = vsel %vm219, %v537, 0
    %544 = vmatpush.bf16.msra.mxu0 0
    %545 = vmatpush.bf16.msra.mxu0 0
    %546 = vmatpush.bf16.msra.mxu0 0
    %547 = vmatpush.bf16.msra.mxu0 0
    %548 = vmatpush.bf16.msra.mxu0 0
    %549 = vmatpush.bf16.msra.mxu0 0
    %550 = vmatpush.bf16.msra.mxu0 0
    %551 = vmatpush.bf16.msra.mxu0 %v542
    %552 = vmatmul.bf16.gmra.mxu0 %v539
    %v553 = vpop.f32.mrf.mxu0
    %v554 = vadd.f32 0.0, %v553
    %v555 = vpop.f32.mrf.mxu0
    %556 = vdwg.mxu0
    %557 = vrot.lane.b32.xlu0 %v142, 48
    %v558 = vpop.permute.xlu0 %557
    %v560 = vsel %vm120, %v535, 0
    %v563 = vsel %vm219, %v558, 0
    %565 = vmatpush.bf16.msra.mxu0 0
    %566 = vmatpush.bf16.msra.mxu0 0
    %567 = vmatpush.bf16.msra.mxu0 0
    %568 = vmatpush.bf16.msra.mxu0 0
    %569 = vmatpush.bf16.msra.mxu0 0
    %570 = vmatpush.bf16.msra.mxu0 0
    %571 = vmatpush.bf16.msra.mxu0 0
    %572 = vmatpush.bf16.msra.mxu0 %v563
    %573 = vmatmul.bf16.gmra.mxu0 %v560
    %v574 = vpop.f32.mrf.mxu0
    %v575 = vadd.f32 0.0, %v574
    %v576 = vpop.f32.mrf.mxu0
    %577 = vdwg.mxu0
    %v578 = vpack.c.bf16 %v575, %v554
    %s579 = scalar_lea.vmem [#allocation7], 8
    %v580 = vld [vmem:[%s579] sm:$0xf]
    %v582 = vsel %vm120, %v578, 0
    %v585 = vsel %vm219, %v580, 0
    %587 = vmatpush.bf16.msra.mxu0 0
    %588 = vmatpush.bf16.msra.mxu0 0
    %589 = vmatpush.bf16.msra.mxu0 0
    %590 = vmatpush.bf16.msra.mxu0 0
    %591 = vmatpush.bf16.msra.mxu0 0
    %592 = vmatpush.bf16.msra.mxu0 0
    %593 = vmatpush.bf16.msra.mxu0 0
    %594 = vmatpush.bf16.msra.mxu0 %v585
    %595 = vmatmul.bf16.gmra.mxu0 %v582
    %v596 = vpop.f32.mrf.mxu0
    %v597 = vadd.f32 0.0, %v596
    %v598 = vpop.f32.mrf.mxu0
    %v599 = vadd.f32 0.0, %v598
    %600 = vdwg.mxu0
    %v601 = vadd.f32 %v436, %v597
    %v602 = vadd.f32 %v438, %v599
    %603 = vrot.lane.b32.xlu0 %v117, 104
    %v604 = vpop.permute.xlu0 %603
    %605 = vrot.lane.b32.xlu0 %v117, 72
    %v606 = vpop.permute.xlu0 %605
    %v608 = vsel %vm120, %v604, 0
    %v611 = vsel %vm120, %v606, 0
    %613 = vmatpush.bf16.xpose.msra.mxu0 0
    %614 = vmatpush.bf16.xpose.msra.mxu0 0
    %615 = vmatpush.bf16.xpose.msra.mxu0 0
    %616 = vmatpush.bf16.xpose.msra.mxu0 0
    %617 = vmatpush.bf16.xpose.msra.mxu0 0
    %618 = vmatpush.bf16.xpose.msra.mxu0 0
    %619 = vmatpush.bf16.xpose.msra.mxu0 0
    %620 = vmatpush.bf16.xpose.msra.mxu0 %v611
    %621 = vmatmul.bf16.gmra.mxu0 %v608
    %v622 = vpop.f32.mrf.mxu0
    %v623 = vadd.f32 0.0, %v622
    %v624 = vpop.f32.mrf.mxu0
    %625 = vdwg.mxu0
    %626 = vrot.lane.b32.xlu0 %v142, 104
    %v627 = vpop.permute.xlu0 %626
    %628 = vrot.lane.b32.xlu0 %v142, 72
    %v629 = vpop.permute.xlu0 %628
    %v631 = vsel %vm120, %v627, 0
    %v634 = vsel %vm120, %v629, 0
    %636 = vmatpush.bf16.xpose.msra.mxu0 0
    %637 = vmatpush.bf16.xpose.msra.mxu0 0
    %638 = vmatpush.bf16.xpose.msra.mxu0 0
    %639 = vmatpush.bf16.xpose.msra.mxu0 0
    %640 = vmatpush.bf16.xpose.msra.mxu0 0
    %641 = vmatpush.bf16.xpose.msra.mxu0 0
    %642 = vmatpush.bf16.xpose.msra.mxu0 0
    %643 = vmatpush.bf16.xpose.msra.mxu0 %v634
    %644 = vmatmul.bf16.gmra.mxu0 %v631
    %v645 = vpop.f32.mrf.mxu0
    %v646 = vadd.f32 0.0, %v645
    %v647 = vpop.f32.mrf.mxu0
    %648 = vdwg.mxu0
    %v649 = vsel %vm120, %v623, -inf
    %650 = vmax.xlane.f32.xlu0 %v649
    %v651 = vpop.xlane.xlu0 %650
    %v652 = vsel %vm120, %v646, -inf
    %653 = vmax.xlane.f32.xlu0 %v652
    %v654 = vpop.xlane.xlu0 %653
    %v655 = vsub.f32 %v623, %v651
    %v656 = vsub.f32 %v646, %v654
    %v657 = vmul.f32 %v655, 1.442695
    %v658 = vpow.pop %v657
    %v659 = vmul.f32 %v656, 1.442695
    %v660 = vpow.pop %v659
    %v661 = vsel %vm120, %v658, 0.0
    %662 = vadd.xlane.f32.xlu0 %v661
    %v663 = vpop.xlane.xlu0 %662
    %v664 = vsel %vm120, %v660, 0.0
    %665 = vadd.xlane.f32.xlu0 %v664
    %v666 = vpop.xlane.xlu0 %665
    %v667 = vrcp.pop %v663
    %v668 = vmul.f32 %v663, %v667
    %v669 = vsub.f32 1.0, %v668
    %v670 = vmul.f32 %v667, %v669
    %v671 = vadd.f32 %v667, %v670
    %vm672 = vweird.f32 %v663
    %vm673 = vweird.f32 %v667
    %vm674 = vmor %vm672, %vm673
    %v675 = vsel %vm674, %v667, %v671
    %v676 = vand.u32 2147483647, %v663
    %vm677 = vcmp.eq.f32.partialorder %v676, 8.507059e+37
    %v678 = vand.u32 %v663, 2147483648
    %v679 = vor.u32 1.1754944e-38, %v678
    %v680 = vsel %vm677, %v679, %v675
    %v681 = vmul.f32 %v658, %v680
    %v682 = vrcp.pop %v666
    %v683 = vmul.f32 %v666, %v682
    %v684 = vsub.f32 1.0, %v683
    %v685 = vmul.f32 %v682, %v684
    %v686 = vadd.f32 %v682, %v685
    %vm687 = vweird.f32 %v666
    %vm688 = vweird.f32 %v682
    %vm689 = vmor %vm687, %vm688
    %v690 = vsel %vm689, %v682, %v686
    %v691 = vand.u32 2147483647, %v666
    %vm692 = vcmp.eq.f32.partialorder %v691, 8.507059e+37
    %v693 = vand.u32 %v666, 2147483648
    %v694 = vor.u32 1.1754944e-38, %v693
    %v695 = vsel %vm692, %v694, %v690
    %v696 = vmul.f32 %v660, %v695
    %v697 = vpack.c.bf16 %v681, %v681
    %v698 = vpack.c.bf16 %v696, %v696
    %699 = vrot.lane.b32.xlu0 %v117, 40
    %v700 = vpop.permute.xlu0 %699
    %v702 = vsel %vm120, %v697, 0
    %v705 = vsel %vm219, %v700, 0
    %707 = vmatpush.bf16.msra.mxu0 0
    %708 = vmatpush.bf16.msra.mxu0 0
    %709 = vmatpush.bf16.msra.mxu0 0
    %710 = vmatpush.bf16.msra.mxu0 0
    %711 = vmatpush.bf16.msra.mxu0 0
    %712 = vmatpush.bf16.msra.mxu0 0
    %713 = vmatpush.bf16.msra.mxu0 0
    %714 = vmatpush.bf16.msra.mxu0 %v705
    %715 = vmatmul.bf16.gmra.mxu0 %v702
    %v716 = vpop.f32.mrf.mxu0
    %v717 = vadd.f32 0.0, %v716
    %v718 = vpop.f32.mrf.mxu0
    %719 = vdwg.mxu0
    %720 = vrot.lane.b32.xlu0 %v142, 40
    %v721 = vpop.permute.xlu0 %720
    %v723 = vsel %vm120, %v698, 0
    %v726 = vsel %vm219, %v721, 0
    %728 = vmatpush.bf16.msra.mxu0 0
    %729 = vmatpush.bf16.msra.mxu0 0
    %730 = vmatpush.bf16.msra.mxu0 0
    %731 = vmatpush.bf16.msra.mxu0 0
    %732 = vmatpush.bf16.msra.mxu0 0
    %733 = vmatpush.bf16.msra.mxu0 0
    %734 = vmatpush.bf16.msra.mxu0 0
    %735 = vmatpush.bf16.msra.mxu0 %v726
    %736 = vmatmul.bf16.gmra.mxu0 %v723
    %v737 = vpop.f32.mrf.mxu0
    %v738 = vadd.f32 0.0, %v737
    %v739 = vpop.f32.mrf.mxu0
    %740 = vdwg.mxu0
    %v741 = vpack.c.bf16 %v738, %v717
    %s742 = scalar_lea.vmem [#allocation7], 12
    %v743 = vld [vmem:[%s742] sm:$0xf]
    %v745 = vsel %vm120, %v741, 0
    %v748 = vsel %vm219, %v743, 0
    %750 = vmatpush.bf16.msra.mxu0 0
    %751 = vmatpush.bf16.msra.mxu0 0
    %752 = vmatpush.bf16.msra.mxu0 0
    %753 = vmatpush.bf16.msra.mxu0 0
    %754 = vmatpush.bf16.msra.mxu0 0
    %755 = vmatpush.bf16.msra.mxu0 0
    %756 = vmatpush.bf16.msra.mxu0 0
    %757 = vmatpush.bf16.msra.mxu0 %v748
    %758 = vmatmul.bf16.gmra.mxu0 %v745
    %v759 = vpop.f32.mrf.mxu0
    %v760 = vadd.f32 0.0, %v759
    %v761 = vpop.f32.mrf.mxu0
    %v762 = vadd.f32 0.0, %v761
    %763 = vdwg.mxu0
    %v764 = vadd.f32 %v601, %v760
    %v765 = vadd.f32 %v602, %v762
    %766 = vst.msk [vmem:[#allocation9] sm:$0xff] %vm120, %v196
    %767 = vst.msk [vmem:[#allocation9 + $0x8] sm:$0xff] %vm120, %v337
    %768 = vst.msk [vmem:[#allocation9 + $0x10] sm:$0xff] %vm120, %v518
    %769 = vst.msk [vmem:[#allocation9 + $0x18] sm:$0xff] %vm120, %v681
    %770 = vst.msk [vmem:[#allocation9 + $0x20] sm:$0xff] %vm120, %v211
    %771 = vst.msk [vmem:[#allocation9 + $0x28] sm:$0xff] %vm120, %v352
    %772 = vst.msk [vmem:[#allocation9 + $0x30] sm:$0xff] %vm120, %v533
    %773 = vst.msk [vmem:[#allocation9 + $0x38] sm:$0xff] %vm120, %v696
    %v774 = vld [vmem:[%s4] sm:$0x1]
    %v776 = vperm.slane %v774, 0
    %v778 = vadd.f32 %v764, %v776
    %v779 = vadd.f32 %v765, %v776
    %780 = vst.msk [vmem:[#allocation8] sm:$0xff] %vm95, %v778
    %781 = vst.msk [vmem:[#allocation8 + $0x8] sm:$0xff] %vm95, %v779
    // Predicated region
    $region34: #{tpu_custom_call.1} parent=1 // pred_check
      _
    $region35: #{tpu_custom_call.1} parent=1 // pred_check_branch
      %783 = sbr.rel (0) target = $region37
    $region36: #{tpu_custom_call.1} parent=1 // pred_region
      %785 = vsyncadd [#allocation4], 0
      %s786 = sshll.u32 [#allocation8], 4
      %s787 = int_to_ptr.vmem [resolvable:$true] %s786
      %s788 = sshll.u32 %s5, 4
      %s789 = int_to_ptr.hbm [resolvable:$true] %s788
      %794 = dma.vmem_to_hbm [thread:$0]  %s787, 256, %s789, [#allocation4], 128, 128, 8
    $region37: #{tpu_custom_call.1} parent=1 // pred_fallthru
      _
    // Predicated region
    $region38: #{tpu_custom_call.1} parent=1 // pred_check
      _
    $region39: #{tpu_custom_call.1} parent=1 // pred_check_branch
      %796 = sbr.rel (0) target = $region41
    $region40: #{tpu_custom_call.1} parent=1 // pred_region
      %798 = vsyncadd [#allocation10], 0
      %s799 = sshll.u32 [#allocation9], 4
      %s800 = int_to_ptr.vmem [resolvable:$true] %s799
      %s801 = sshll.u32 %s6, 4
      %s802 = int_to_ptr.hbm [resolvable:$true] %s801
      %807 = dma.vmem_to_hbm [thread:$0]  %s800, 1024, %s802, [#allocation10], 128, 128, 8
    $region41: #{tpu_custom_call.1} parent=1 // pred_fallthru
      _
    // Predicated region
    $region42: #{tpu_custom_call.1} parent=1 // pred_check
      _
    $region43: #{tpu_custom_call.1} parent=1 // pred_check_branch
      %809 = sbr.rel (0) target = $region45
    $region44: #{tpu_custom_call.1} parent=1 // pred_region
      %811 = dma.done [#allocation4], 256
    $region45: #{tpu_custom_call.1} parent=1 // pred_fallthru
      _
    // Predicated region
    $region46: #{tpu_custom_call.1} parent=1 // pred_check
      _
    $region47: #{tpu_custom_call.1} parent=1 // pred_check_branch
      %813 = sbr.rel (0) target = $region49
    $region48: #{tpu_custom_call.1} parent=1 // pred_region
      %815 = dma.done [#allocation10], 1024
    $region49: #{tpu_custom_call.1} parent=1 // pred_fallthru
      _
    %816 = vsyncpa [#allocation3], 1
    %817 = vsyncpa [#allocation6], 1
    %818 = vsyncpa [#allocation4], 1
    %819 = vsyncpa [#allocation10], 1

</llo_original>
